<compile_context>
chip_gen: v7x
topology: tpu7x:2x2x1
jax: 0.10.0
libtpu: 0.0.40
codegen_flags: <defaults>
</compile_context>

<pallas_src>
import functools

import jax
import jax.numpy as jnp
from jax.experimental import pallas as pl
from jax.experimental.pallas import tpu as pltpu


def _label_smoothing_kernel(target_ref, pred_ref, out_ref,
                            m_sc, l_sc, ws_sc, *,
                            confidence, smooth_val, num_classes,
                            n_rows, block_rows, block_cols, mask_cols):
    i = pl.program_id(0)          # row block     ("parallel")
    j = pl.program_id(1)          # class block   ("arbitrary" reduction axis)

    @pl.when(j == 0)
    def _init():
        m_sc[...] = jnp.full_like(m_sc, -jnp.inf)
        l_sc[...] = jnp.zeros_like(l_sc)
        ws_sc[...] = jnp.zeros_like(ws_sc)

    p = pred_ref[...]             # (tb, tc) in the input dtype (f32 / bf16)
    tgt = target_ref[...]         # (tb, 1) int32

    col = jax.lax.broadcasted_iota(jnp.int32, p.shape, 1) + j * block_cols
    pf = p.astype(jnp.float32)
    # Fused per-class weights: smoothing/(C-1) everywhere, confidence at target.
    w = jnp.where(col == tgt, jnp.float32(confidence), jnp.float32(smooth_val))

    if mask_cols:                 # static: last class block is padded
        valid = col < num_classes
        pf_lse = jnp.where(valid, pf, -jnp.inf)
        pf_ws = jnp.where(valid, pf, 0.0)
        w = jnp.where(valid, w, 0.0)
        m_blk = jnp.max(pf_lse, axis=-1, keepdims=True)
    else:
        pf_lse = pf
        pf_ws = pf
        # max is exact in bf16; only the (tb,1) result is upcast.
        m_blk = jnp.max(p, axis=-1, keepdims=True).astype(jnp.float32)

    # Online log-sum-exp accumulation across class blocks.
    m_prev = m_sc[...]
    m_new = jnp.maximum(m_prev, m_blk)
    alpha = jnp.exp(m_prev - m_new)
    l_sc[...] = alpha * l_sc[...] + jnp.sum(jnp.exp(pf_lse - m_new),
                                            axis=-1, keepdims=True)
    m_sc[...] = m_new
    # Weighted-logit sum is linear in pred -> accumulate directly, no rescale.
    ws_sc[...] += jnp.sum(w * pf_ws, axis=-1, keepdims=True)

    @pl.when(j == pl.num_programs(1) - 1)
    def _finalize():
        per_row = (m_sc[...] + jnp.log(l_sc[...])) - ws_sc[...]
        rows = (jax.lax.broadcasted_iota(jnp.int32, per_row.shape, 0)
                + i * block_rows)
        out_ref[...] = jnp.where(rows < n_rows, per_row, 0.0)   # mask tail rows


def _vmem_plan(n, c, in_itemsize):
    """Pick (block_rows, block_cols, vmem_limit_bytes) from this chip's VMEM."""
    lane, sub = 128, 8
    cap = 64 * 1024 * 1024                         # v7x per-TC VMEM (smallest gen)
    try:
        cap = int(pltpu.get_tpu_info().vmem_capacity_bytes)   # 128 MiB on v5e/v6e
    except Exception:
        pass
    budget = int(cap * 0.65)                       # compute working-set target
    vmem_limit = min(int(cap * 0.85), budget + 24 * 1024 * 1024)

    def rup(x, m):
        return ((x + m - 1) // m) * m

    def per_row_bytes(cols):
        cols_pad = max(lane, rup(cols, lane))      # lanes pad to 128 in VMEM
        pred = 2 * cols_pad * in_itemsize          # double-buffered pred tile
        tmps = 3 * cols_pad * 4                    # live f32 temporaries (pf/exp/w)
        narrow = 7 * lane * 4                      # target(x2)+out(x2)+3 scratch
        return pred + tmps + narrow

    # Keep at least two row blocks so both v7x TensorCores get work.
    row_cap = n if n <= sub else min(n, rup(pl.cdiv(n, 2), sub))

    rows_full_c = budget // per_row_bytes(c)
    if rows_full_c >= min(row_cap, 256):           # full-C row blocks are big enough
        block_rows = min(int(rows_full_c), row_cap)
        if block_rows < n:
            block_rows = max(sub, (block_rows // sub) * sub)
        return block_rows, c, vmem_limit

    # Vocab-sized C: split the class axis (online-LSE path), keep row tiles big.
    block_rows = min(row_cap, 256)
    if block_rows < n:
        block_rows = max(sub, (block_rows // sub) * sub)
    per_col = 2 * in_itemsize + 3 * 4
    cols = (budget // block_rows - 7 * lane * 4) // per_col
    cols = max(lane, (int(cols) // lane) * lane)
    if cols >= c:
        return block_rows, c, vmem_limit
    return block_rows, cols, vmem_limit


def label_smoothing_loss(pred, target, *, classes, smoothing=0.0,
                         block_rows=None, block_cols=None):
    """pred: (N, C) f32/bf16 logits, target: (N,) int. Returns scalar f32 loss."""
    n, c = pred.shape
    assert c == classes and classes > 1
    confidence = 1.0 - smoothing
    smooth_val = smoothing / (classes - 1)

    br, bc, vmem_limit = _vmem_plan(n, c, jnp.dtype(pred.dtype).itemsize)
    block_rows = min(block_rows or br, n)
    block_cols = min(block_cols or bc, c)
    if block_rows < n:
        assert block_rows % 8 == 0, "block_rows must be a multiple of 8"
    if block_cols < c:
        assert block_cols % 128 == 0, "block_cols must be a multiple of 128"
    mask_cols = (block_cols < c) and (c % block_cols != 0)

    target2d = target.astype(jnp.int32).reshape(n, 1)

    kernel = functools.partial(
        _label_smoothing_kernel,
        confidence=confidence, smooth_val=smooth_val, num_classes=c,
        n_rows=n, block_rows=block_rows, block_cols=block_cols,
        mask_cols=mask_cols)

    grid = (pl.cdiv(n, block_rows), pl.cdiv(c, block_cols))
    per_row = pl.pallas_call(
        kernel,
        out_shape=jax.ShapeDtypeStruct((n, 1), jnp.float32),
        grid_spec=pltpu.PrefetchScalarGridSpec(
            num_scalar_prefetch=0,
            grid=grid,
            in_specs=[
                pl.BlockSpec((block_rows, 1), lambda i, j: (i, 0)),            # target
                pl.BlockSpec((block_rows, block_cols), lambda i, j: (i, j)),   # pred
            ],
            out_specs=pl.BlockSpec((block_rows, 1), lambda i, j: (i, 0)),
            scratch_shapes=[pltpu.VMEM((block_rows, 1), jnp.float32)] * 3,
        ),
        compiler_params=pltpu.CompilerParams(
            dimension_semantics=("parallel", "arbitrary"),
            vmem_limit_bytes=vmem_limit,
        ),
    )(target2d, pred)

    # Final reduction + mean in plain JAX (cheap; keeps row axis parallel).
    return jnp.sum(per_row) / jnp.float32(n)


def _reference(pred, target, classes, smoothing):
    logp = jax.nn.log_softmax(pred.astype(jnp.float32), axis=-1)
    true_dist = jnp.full_like(logp, smoothing / (classes - 1))
    true_dist = true_dist.at[jnp.arange(pred.shape[0]), target].set(1.0 - smoothing)
    return jnp.mean(jnp.sum(-true_dist * logp, axis=-1))


if __name__ == "__main__":
    key = jax.random.PRNGKey(0)
    smoothing = 0.1
    k = jax.random.split(key, 8)

    # Test 1: small f32 batch (auto-planned blocks, 2 row blocks for megacore).
    C = 20
    pred = jax.random.normal(k[0], (16, C), dtype=jnp.float32)
    target = jax.random.randint(k[1], (16,), 0, C, dtype=jnp.int32)
    loss = jax.block_until_ready(
        label_smoothing_loss(pred, target, classes=C, smoothing=smoothing))
    ref = _reference(pred, target, C, smoothing)
    assert jnp.allclose(loss, ref, atol=1e-5, rtol=1e-5), (loss, ref)

    # Test 2: multi-row-block grid with a ragged tail (200 = 3*64 + 8), f32.
    pred2 = jax.random.normal(k[2], (200, C), dtype=jnp.float32)
    target2 = jax.random.randint(k[3], (200,), 0, C, dtype=jnp.int32)
    loss2 = jax.block_until_ready(
        label_smoothing_loss(pred2, target2, classes=C, smoothing=smoothing,
                             block_rows=64))
    ref2 = _reference(pred2, target2, C, smoothing)
    assert jnp.allclose(loss2, ref2, atol=1e-5, rtol=1e-5), (loss2, ref2)

    # Test 3: bf16 activations, f32 compute in-kernel.
    pred3 = jax.random.normal(k[4], (64, C), dtype=jnp.float32).astype(jnp.bfloat16)
    target3 = jax.random.randint(k[5], (64,), 0, C, dtype=jnp.int32)
    loss3 = jax.block_until_ready(
        label_smoothing_loss(pred3, target3, classes=C, smoothing=smoothing))
    ref3 = _reference(pred3, target3, C, smoothing)
    assert jnp.allclose(loss3, ref3, atol=1e-4, rtol=1e-4), (loss3, ref3)

    # Test 4: class-axis split (online-LSE path) with a ragged class tail
    # (C=200, block_cols=128 -> 2 class blocks, last one column-masked).
    C4 = 200
    pred4 = jax.random.normal(k[6], (64, C4), dtype=jnp.float32)
    target4 = jax.random.randint(k[7], (64,), 0, C4, dtype=jnp.int32)
    loss4 = jax.block_until_ready(
        label_smoothing_loss(pred4, target4, classes=C4, smoothing=smoothing,
                             block_cols=128))
    ref4 = _reference(pred4, target4, C4, smoothing)
    assert jnp.allclose(loss4, ref4, atol=1e-5, rtol=1e-5), (loss4, ref4)

    print("KERNEL_OK")
</pallas_src>

<mosaic_0001>
module attributes {stable_mosaic.version = 11 : i64} {
  func.func @_label_smoothing_kernel(%arg0: i32, %arg1: i32, %arg2: memref<8x1xi32, #tpu.memory_space<vmem>>, %arg3: memref<8x20xf32, #tpu.memory_space<vmem>>, %arg4: memref<8x1xf32, #tpu.memory_space<vmem>>, %arg5: memref<8x1xf32, #tpu.memory_space<vmem>>, %arg6: memref<8x1xf32, #tpu.memory_space<vmem>>, %arg7: memref<8x1xf32, #tpu.memory_space<vmem>>) attributes {dimension_semantics = [#tpu.dimension_semantics<parallel>, #tpu.dimension_semantics<arbitrary>], iteration_bounds = array<i64: 2, 1>, scalar_prefetch = 0 : i64, scratch_operands = 3 : i64, tpu.core_type = #tpu.core_type<tc>, window_params = [{transform_indices = @transform_0, window_bounds = array<i64: 8, 1>}, {transform_indices = @transform_1, window_bounds = array<i64: 8, 20>}, {transform_indices = @transform_2, window_bounds = array<i64: 8, 1>}]} {
    %c0_i32 = arith.constant 0 : i32
    %0 = arith.cmpi eq, %arg1, %c0_i32 : i32
    %1 = arith.extui %0 : i1 to i32
    %c0_i32_0 = arith.constant 0 : i32
    %2 = arith.cmpi ne, %1, %c0_i32_0 : i32
    scf.if %2 {
      %cst_22 = arith.constant 0xFF800000 : f32
      %39 = vector.broadcast %cst_22 : f32 to vector<8x1xf32>
      %c0_23 = arith.constant 0 : index
      %c0_24 = arith.constant 0 : index
      %40 = vector.load %arg5[%c0_23, %c0_24] : memref<8x1xf32, #tpu.memory_space<vmem>>, vector<8x1xf32>
      tpu.vector_store %arg5[%c0_23, %c0_24], %39 {strides = array<i32>} : memref<8x1xf32, #tpu.memory_space<vmem>>, vector<8x1xf32>,
      %cst_25 = arith.constant 0.000000e+00 : f32
      %41 = vector.broadcast %cst_25 : f32 to vector<8x1xf32>
      %c0_26 = arith.constant 0 : index
      %c0_27 = arith.constant 0 : index
      %42 = vector.load %arg6[%c0_26, %c0_27] : memref<8x1xf32, #tpu.memory_space<vmem>>, vector<8x1xf32>
      tpu.vector_store %arg6[%c0_26, %c0_27], %41 {strides = array<i32>} : memref<8x1xf32, #tpu.memory_space<vmem>>, vector<8x1xf32>,
      %cst_28 = arith.constant 0.000000e+00 : f32
      %43 = vector.broadcast %cst_28 : f32 to vector<8x1xf32>
      %c0_29 = arith.constant 0 : index
      %c0_30 = arith.constant 0 : index
      %44 = vector.load %arg7[%c0_29, %c0_30] : memref<8x1xf32, #tpu.memory_space<vmem>>, vector<8x1xf32>
      tpu.vector_store %arg7[%c0_29, %c0_30], %43 {strides = array<i32>} : memref<8x1xf32, #tpu.memory_space<vmem>>, vector<8x1xf32>,
    } else {
    }
    %c0 = arith.constant 0 : index
    %c0_1 = arith.constant 0 : index
    %3 = vector.load %arg3[%c0, %c0_1] : memref<8x20xf32, #tpu.memory_space<vmem>>, vector<8x20xf32>
    %c0_2 = arith.constant 0 : index
    %c0_3 = arith.constant 0 : index
    %4 = vector.load %arg2[%c0_2, %c0_3] : memref<8x1xi32, #tpu.memory_space<vmem>>, vector<8x1xi32>
    %5 = tpu.iota {dimensions = array<i32: 1>} : vector<8x20xi32>
    %c20_i32 = arith.constant 20 : i32
    %6 = arith.muli %arg1, %c20_i32 : i32
    %7 = vector.broadcast %6 : i32 to vector<8x20xi32>
    %8 = arith.addi %5, %7 : vector<8x20xi32>
    %9 = vector.broadcast %4 : vector<8x1xi32> to vector<8x20xi32>
    %10 = arith.cmpi eq, %8, %9 : vector<8x20xi32>
    %cst = arith.constant 0.899999976 : f32
    %cst_4 = arith.constant 0.00526315812 : f32
    %11 = vector.broadcast %cst : f32 to vector<8x20xf32>
    %12 = vector.broadcast %cst_4 : f32 to vector<8x20xf32>
    %13 = arith.select %10, %11, %12 : vector<8x20xi1>, vector<8x20xf32>
    %cst_5 = arith.constant dense<0xFF800000> : vector<8xf32>
    %14 = vector.multi_reduction <maximumf>, %3, %cst_5 [1] : vector<8x20xf32> to vector<8xf32>
    %15 = vector.shape_cast %14 : vector<8xf32> to vector<8x1xf32>
    %c0_6 = arith.constant 0 : index
    %c0_7 = arith.constant 0 : index
    %16 = vector.load %arg5[%c0_6, %c0_7] : memref<8x1xf32, #tpu.memory_space<vmem>>, vector<8x1xf32>
    %17 = arith.maximumf %16, %15 : vector<8x1xf32>
    %18 = arith.subf %16, %17 : vector<8x1xf32>
    %19 = math.exp %18 : vector<8x1xf32>
    %c0_8 = arith.constant 0 : index
    %c0_9 = arith.constant 0 : index
    %20 = vector.load %arg6[%c0_8, %c0_9] : memref<8x1xf32, #tpu.memory_space<vmem>>, vector<8x1xf32>
    %21 = arith.mulf %19, %20 : vector<8x1xf32>
    %22 = vector.broadcast %17 : vector<8x1xf32> to vector<8x20xf32>
    %23 = arith.subf %3, %22 : vector<8x20xf32>
    %24 = math.exp %23 : vector<8x20xf32>
    %cst_10 = arith.constant dense<0.000000e+00> : vector<8xf32>
    %25 = vector.multi_reduction <add>, %24, %cst_10 [1] : vector<8x20xf32> to vector<8xf32>
    %26 = vector.shape_cast %25 : vector<8xf32> to vector<8x1xf32>
    %27 = arith.addf %21, %26 : vector<8x1xf32>
    %c0_11 = arith.constant 0 : index
    %c0_12 = arith.constant 0 : index
    %28 = vector.load %arg6[%c0_11, %c0_12] : memref<8x1xf32, #tpu.memory_space<vmem>>, vector<8x1xf32>
    tpu.vector_store %arg6[%c0_11, %c0_12], %27 {strides = array<i32>} : memref<8x1xf32, #tpu.memory_space<vmem>>, vector<8x1xf32>,
    %c0_13 = arith.constant 0 : index
    %c0_14 = arith.constant 0 : index
    %29 = vector.load %arg5[%c0_13, %c0_14] : memref<8x1xf32, #tpu.memory_space<vmem>>, vector<8x1xf32>
    tpu.vector_store %arg5[%c0_13, %c0_14], %17 {strides = array<i32>} : memref<8x1xf32, #tpu.memory_space<vmem>>, vector<8x1xf32>,
    %c0_15 = arith.constant 0 : index
    %c0_16 = arith.constant 0 : index
    %30 = vector.load %arg7[%c0_15, %c0_16] : memref<8x1xf32, #tpu.memory_space<vmem>>, vector<8x1xf32>
    %31 = arith.mulf %13, %3 : vector<8x20xf32>
    %cst_17 = arith.constant dense<0.000000e+00> : vector<8xf32>
    %32 = vector.multi_reduction <add>, %31, %cst_17 [1] : vector<8x20xf32> to vector<8xf32>
    %33 = vector.shape_cast %32 : vector<8xf32> to vector<8x1xf32>
    %34 = arith.addf %30, %33 : vector<8x1xf32>
    %c0_18 = arith.constant 0 : index
    %c0_19 = arith.constant 0 : index
    %35 = vector.load %arg7[%c0_18, %c0_19] : memref<8x1xf32, #tpu.memory_space<vmem>>, vector<8x1xf32>
    tpu.vector_store %arg7[%c0_18, %c0_19], %34 {strides = array<i32>} : memref<8x1xf32, #tpu.memory_space<vmem>>, vector<8x1xf32>,
    %c0_i32_20 = arith.constant 0 : i32
    %36 = arith.cmpi eq, %arg1, %c0_i32_20 : i32
    %37 = arith.extui %36 : i1 to i32
    %c0_i32_21 = arith.constant 0 : i32
    %38 = arith.cmpi ne, %37, %c0_i32_21 : i32
    scf.if %38 {
      %c0_22 = arith.constant 0 : index
      %c0_23 = arith.constant 0 : index
      %39 = vector.load %arg5[%c0_22, %c0_23] : memref<8x1xf32, #tpu.memory_space<vmem>>, vector<8x1xf32>
      %c0_24 = arith.constant 0 : index
      %c0_25 = arith.constant 0 : index
      %40 = vector.load %arg6[%c0_24, %c0_25] : memref<8x1xf32, #tpu.memory_space<vmem>>, vector<8x1xf32>
      %41 = math.log %40 : vector<8x1xf32>
      %42 = arith.addf %39, %41 : vector<8x1xf32>
      %c0_26 = arith.constant 0 : index
      %c0_27 = arith.constant 0 : index
      %43 = vector.load %arg7[%c0_26, %c0_27] : memref<8x1xf32, #tpu.memory_space<vmem>>, vector<8x1xf32>
      %44 = arith.subf %42, %43 : vector<8x1xf32>
      %45 = tpu.iota {dimensions = array<i32: 0>} : vector<8x1xi32>
      %c8_i32 = arith.constant 8 : i32
      %46 = arith.muli %arg0, %c8_i32 : i32
      %47 = vector.broadcast %46 : i32 to vector<8x1xi32>
      %48 = arith.addi %45, %47 : vector<8x1xi32>
      %c16_i32 = arith.constant 16 : i32
      %49 = vector.broadcast %c16_i32 : i32 to vector<8x1xi32>
      %50 = arith.cmpi slt, %48, %49 : vector<8x1xi32>
      %cst_28 = arith.constant 0.000000e+00 : f32
      %51 = vector.broadcast %cst_28 : f32 to vector<8x1xf32>
      %52 = arith.select %50, %44, %51 : vector<8x1xi1>, vector<8x1xf32>
      %c0_29 = arith.constant 0 : index
      %c0_30 = arith.constant 0 : index
      %53 = vector.load %arg4[%c0_29, %c0_30] : memref<8x1xf32, #tpu.memory_space<vmem>>, vector<8x1xf32>
      tpu.vector_store %arg4[%c0_29, %c0_30], %52 {strides = array<i32>} : memref<8x1xf32, #tpu.memory_space<vmem>>, vector<8x1xf32>,
    } else {
    }
    return
  }
  func.func @transform_0(%arg0: i32, %arg1: i32) -> (i32, i32) {
    %c0_i32 = arith.constant 0 : i32
    %c0_i32_0 = arith.constant 0 : i32
    return %arg0, %c0_i32 : i32, i32
  }
  func.func @transform_1(%arg0: i32, %arg1: i32) -> (i32, i32) {
    %c0_i32 = arith.constant 0 : i32
    return %arg0, %arg1 : i32, i32
  }
  func.func @transform_2(%arg0: i32, %arg1: i32) -> (i32, i32) {
    %c0_i32 = arith.constant 0 : i32
    %c0_i32_0 = arith.constant 0 : i32
    return %arg0, %c0_i32 : i32, i32
  }
}

</mosaic_0001>

<llo_original>
// kernel: tpu_custom_call.1
$region0: #{tpu_custom_call.1}
  #allocation0 [shape = 'u32[]', space=smem, size = 0x4, offset = 0x4, fixed_abs, tag = 'smem constant byte address 0x4 - core index']
  #allocation1 [shape = 'u32[144,128]{1,0:T(1,128)}', space=vmem, size = 0x12000, scoped, tag = 'internal scratch']
  #allocation2 [shape = 'f32[8,1]{1,0:T(8,128)}', space=vmem, size = 0x1000, scoped, tag = 'scratch operand']
  #allocation3 [shape = 'f32[8,1]{1,0:T(8,128)}', space=vmem, size = 0x1000, scoped, tag = 'scratch operand']
  #allocation4 [shape = 'f32[8,1]{1,0:T(8,128)}', space=vmem, size = 0x1000, scoped, tag = 'scratch operand']
  %s0 = inlined_call_operand.vmem [shape: s32[16,1], index: 0, kind: input, shape index: {}]
  %s1 = inlined_call_operand.vmem [shape: f32[16,20], index: 1, kind: input, shape index: {}]
  %s2 = inlined_call_operand.vmem [shape: f32[16,1], index: 2, kind: output, shape index: {}]
  %s3 = sld [smem:[#allocation0]]
  $region49: #{tpu_custom_call.1} parent=0
    _
  %s5 = ssub.s32 1, %s3
  %s6 = scalar_select 0, %s5, %s3
  loop: start=0, step=1, limit=4
  $region2: #{tpu_custom_call.1} parent=0 // loop_pre_header
    _
  $region3: #{tpu_custom_call.1} parent=0 // loop_header
    %s8 = sphi 0, %s12
    %p9 = scmp.ge.s32.totalorder %s8, 4
    %s15 = sphi 0, %s27
    %s16 = sphi 0, %s23
    %s17 = sphi 0, %s15
    %s18 = sphi 0, %s16
    %s19 = sphi 0, %s17
    %s20 = sphi 0, %s18
    %s30 = sphi 0, %s32
    %s33 = sphi 0, %s30
    %s34 = sphi 0, %s33
    %s50 = sphi 0, %s34
    %s58 = sphi 0, %s60
    %s61 = sphi 0, %s58
    %s62 = sphi 0, %s61
    %s78 = sphi 0, %s62
    %s84 = sphi 0, %s86
    %s87 = sphi 0, %s84
    %s88 = sphi 0, %s87
    %s104 = sphi 0, %s88
  $region4: #{tpu_custom_call.1} parent=0 // loop_header_branch
    %11 = sbr.rel (%p9) target = $region8
  $region5: #{tpu_custom_call.1} parent=0 // loop_body
    %s13 = ssub.s32 %s8, 1
    %s14 = ssub.s32 %s8, 2
    %s21 = sadd.s32 1, %s16
    %p22 = scmp.ge.s32.totalorder %s21, 1
    %s23 = scalar_select %p22, 0, %s21
    %s24 = sadd.s32 1, %s15
    %s25 = scalar_select %p22, %s24, %s15
    %p26 = scmp.ge.s32.totalorder %s25, 2
    %s27 = scalar_select %p26, 0, %s25
    %s28 = ssub.s32 %s15, %s27
    %p29 = scmp.eq.s32.totalorder %s28, 0
    %s31 = sadd.s32 %s30, 1
    %s32 = scalar_select %p29, %s30, %s31
    %p35 = pneg %p29
    %p36 = scmp.eq.s32.totalorder %s8, 1
    %p37 = por %p35, %p36
    %p38 = scmp.ne.s32.totalorder %s30, %s33
    %p39 = scmp.eq.s32.totalorder %s8, 0
    %p40 = por %p38, %p39
    %p41 = scmp.ne.s32.totalorder %s30, %s33
    %p42 = scmp.eq.s32.totalorder %s13, 1
    %p43 = por %p41, %p42
    %p44 = scmp.ne.s32.totalorder %s33, %s34
    %p45 = scmp.eq.s32.totalorder %s13, 0
    %p46 = por %p44, %p45
    %p47 = scmp.ne.s32.totalorder %s33, %s34
    %p48 = scmp.eq.s32.totalorder %s14, 1
    %p49 = por %p47, %p48
    %p51 = scmp.ne.s32.totalorder %s34, %s50
    %p52 = scmp.eq.s32.totalorder %s14, 0
    %p53 = por %p51, %p52
    %s54 = ssub.s32 %s15, %s27
    %s55 = ssub.s32 %s16, %s23
    %s56 = sor.u32 %s54, %s55
    %p57 = scmp.eq.s32.totalorder %s56, 0
    %s59 = sadd.s32 %s58, 1
    %s60 = scalar_select %p57, %s58, %s59
    %p63 = pneg %p57
    %p64 = scmp.eq.s32.totalorder %s8, 1
    %p65 = por %p63, %p64
    %p66 = scmp.ne.s32.totalorder %s58, %s61
    %p67 = scmp.eq.s32.totalorder %s8, 0
    %p68 = por %p66, %p67
    %p69 = scmp.ne.s32.totalorder %s58, %s61
    %p70 = scmp.eq.s32.totalorder %s13, 1
    %p71 = por %p69, %p70
    %p72 = scmp.ne.s32.totalorder %s61, %s62
    %p73 = scmp.eq.s32.totalorder %s13, 0
    %p74 = por %p72, %p73
    %p75 = scmp.ne.s32.totalorder %s61, %s62
    %p76 = scmp.eq.s32.totalorder %s14, 1
    %p77 = por %p75, %p76
    %p79 = scmp.ne.s32.totalorder %s62, %s78
    %p80 = scmp.eq.s32.totalorder %s14, 0
    %p81 = por %p79, %p80
    %s82 = ssub.s32 %s15, %s27
    %p83 = scmp.eq.s32.totalorder %s82, 0
    %s85 = sadd.s32 %s84, 1
    %s86 = scalar_select %p83, %s84, %s85
    %p89 = pneg %p83
    %p90 = scmp.eq.s32.totalorder %s8, 1
    %p91 = por %p89, %p90
    %p92 = scmp.ne.s32.totalorder %s84, %s87
    %p93 = scmp.eq.s32.totalorder %s8, 0
    %p94 = por %p92, %p93
    %p95 = scmp.ne.s32.totalorder %s84, %s87
    %p96 = scmp.eq.s32.totalorder %s13, 1
    %p97 = por %p95, %p96
    %p98 = scmp.ne.s32.totalorder %s87, %s88
    %p99 = scmp.eq.s32.totalorder %s13, 0
    %p100 = por %p98, %p99
    %p101 = scmp.ne.s32.totalorder %s87, %s88
    %p102 = scmp.eq.s32.totalorder %s14, 1
    %p103 = por %p101, %p102
    %p105 = scmp.ne.s32.totalorder %s88, %s104
    %p106 = scmp.eq.s32.totalorder %s14, 0
    %p107 = por %p105, %p106
    %p108 = scmp.le.s32.totalorder 1, %s8
    %p109 = scmp.lt.s32.totalorder %s8, 3
    %p110 = pnand %p108, %p109
    %p111 = pneg %p110
    // Predicated region
    $region9: #{tpu_custom_call.1} parent=5 // pred_check
      _
    $region10: #{tpu_custom_call.1} parent=5 // pred_check_branch
      %113 = sbr.rel (%p110) target = $region12
    $region11: #{tpu_custom_call.1} parent=5 // pred_region
      %s114 = ssub.s32 %s8, 1
    $region12: #{tpu_custom_call.1} parent=5 // pred_fallthru
      _
    %p115 = scmp.lt.s32.totalorder %s8, 2
    // Predicated region
    $region13: #{tpu_custom_call.1} parent=5 // pred_check
      %p116 = pneg %p115
    $region14: #{tpu_custom_call.1} parent=5 // pred_check_branch
      %118 = sbr.rel (%p116) target = $region16
    $region15: #{tpu_custom_call.1} parent=5 // pred_region
      // Predicated region
      $region17: #{tpu_custom_call.1} parent=15 // pred_check
        %p119 = pneg %p40
      $region18: #{tpu_custom_call.1} parent=15 // pred_check_branch
        %121 = sbr.rel (%p119) target = $region20
      $region19: #{tpu_custom_call.1} parent=15 // pred_region
        %p122 = scmp.lt.s32.totalorder %s15, 1
        %s123 = scalar_select %p122, %s15, 1
        %s124 = smul.addr %s123, 8
        %s125 = scalar_lea.vmem %s0, %s124
      $region20: #{tpu_custom_call.1} parent=15 // pred_fallthru
        _
      // Predicated region
      $region21: #{tpu_custom_call.1} parent=15 // pred_check
        %p126 = pneg %p68
      $region22: #{tpu_custom_call.1} parent=15 // pred_check_branch
        %128 = sbr.rel (%p126) target = $region24
      $region23: #{tpu_custom_call.1} parent=15 // pred_region
        %p129 = scmp.lt.s32.totalorder %s15, 1
        %s130 = scalar_select %p129, %s15, 1
        %p131 = scmp.lt.s32.totalorder %s16, 0
        %s132 = scalar_select %p131, %s16, 0
        %s133 = sadd.s32 %s132, %s130
        %s134 = smul.addr %s133, 8
        %s135 = scalar_lea.vmem %s1, %s134
      $region24: #{tpu_custom_call.1} parent=15 // pred_fallthru
        _
    $region16: #{tpu_custom_call.1} parent=5 // pred_fallthru
      _
    %p136 = scmp.le.s32.totalorder 1, %s8
    %p137 = scmp.lt.s32.totalorder %s8, 3
    %p138 = pnand %p136, %p137
    %p139 = pneg %p138
    // Predicated region
    $region25: #{tpu_custom_call.1} parent=5 // pred_check
      _
    $region26: #{tpu_custom_call.1} parent=5 // pred_check_branch
      %141 = sbr.rel (%p138) target = $region28
    $region27: #{tpu_custom_call.1} parent=5 // pred_region
      %s142 = ssub.s32 %s8, 1
      %p143 = scmp.lt.s32.totalorder %s17, 1
      %s144 = scalar_select %p143, %s17, 1
      %s145 = smul.addr %s144, 8
      %s146 = scalar_lea.vmem %s0, %s145
      %p147 = pneg %p46
      %p148 = pneg %p43
      %p149 = scmp.lt.s32.totalorder %s17, 1
      %s150 = scalar_select %p149, %s17, 1
      %p151 = scmp.lt.s32.totalorder %s18, 0
      %s152 = scalar_select %p151, %s18, 0
      %s153 = sadd.s32 %s152, %s150
      %s154 = smul.addr %s153, 8
      %s155 = scalar_lea.vmem %s1, %s154
      %p156 = pneg %p74
      %p157 = pneg %p71
      %p158 = pneg %p100
      %p159 = pneg %p97
      %p160 = scmp.lt.s32.totalorder %s17, 1
      %s161 = scalar_select %p160, %s17, 1
      %s162 = smul.addr %s161, 8
      %s163 = scalar_lea.vmem %s2, %s162
      %p164 = scmp.lt.s32.totalorder %s17, 1
      %s165 = scalar_select %p164, %s17, 1
      %s166 = smul.addr %s165, 8
      %s167 = scalar_lea.vmem %s0, %s166
      %p168 = scmp.lt.s32.totalorder %s17, 1
      %s169 = scalar_select %p168, %s17, 1
      %p170 = scmp.lt.s32.totalorder %s18, 0
      %s171 = scalar_select %p170, %s18, 0
      %s172 = sadd.s32 %s171, %s169
      %s173 = smul.addr %s172, 8
      %s174 = scalar_lea.vmem %s1, %s173
      %p175 = scmp.lt.s32.totalorder %s17, 1
      %s176 = scalar_select %p175, %s17, 1
      %s177 = smul.addr %s176, 8
      %s178 = scalar_lea.vmem %s2, %s177
      %p179 = scmp.eq.s32.totalorder %s18, 0
      // Predicated region
      $region29: #{tpu_custom_call.1} parent=27 // pred_check
        %p180 = pneg %p179
      $region30: #{tpu_custom_call.1} parent=27 // pred_check_branch
        %182 = sbr.rel (%p180) target = $region32
      $region31: #{tpu_custom_call.1} parent=27 // pred_region
        %vm183 = vcmask 7168
        %184 = vst.msk [vmem:[#allocation2] sm:$0xff] %vm183, -inf
        %185 = vst.msk [vmem:[#allocation3] sm:$0xff] %vm183, 0.0
        %186 = vst.msk [vmem:[#allocation4] sm:$0xff] %vm183, 0.0
      $region32: #{tpu_custom_call.1} parent=27 // pred_fallthru
        _
      %v187 = vld [vmem:[%s174] sm:$0xff]
      %v188 = vld [vmem:[%s167] sm:$0xff]
      %v189 = vlaneseq
      %v190 = vand.u32 %v189, 127
      %s191 = smul.u32 %s18, 20
      %v192 = vstv %s191
      %v193 = vadd.s32 %v190, %v192
      %194 = vset.pattern.permute.xlu0 0
      %195 = vperm.xlu0 %194, %v188
      %v196 = vpop.permute.xlu0 %195
      %vm197 = vcmp.eq.s32.totalorder %v193, %v196
      %v198 = vsel %vm197, 0.9, 0.005263158
      %vm199 = vcmask 162816
      %v200 = vsel %vm199, %v187, -inf
      %201 = vmax.xlane.f32.xlu0 %v200
      %v202 = vpop.xlane.xlu0 %201
      %v203 = vld [vmem:[#allocation2] sm:$0xff]
      %v204 = vmax.f32 %v203, %v202
      %v205 = vsub.f32 %v203, %v204
      %v206 = vmul.f32 %v205, 1.442695
      %v207 = vpow.pop %v206
      %v208 = vld [vmem:[#allocation3] sm:$0xff]
      %v209 = vmul.f32 %v207, %v208
      %211 = vset.pattern.permute.xlu0 0
      %212 = vperm.xlu0 %211, %v204
      %v213 = vpop.permute.xlu0 %212
      %v215 = vsub.f32 %v187, %v213
      %v216 = vmul.f32 %v215, 1.442695
      %v217 = vpow.pop %v216
      %v218 = vsel %vm199, %v217, 0.0
      %219 = vadd.xlane.f32.xlu0 %v218
      %v220 = vpop.xlane.xlu0 %219
      %v221 = vadd.f32 %v209, %v220
      %vm222 = vcmask 7168
      %223 = vst.msk [vmem:[#allocation3] sm:$0xff] %vm222, %v221
      %224 = vst.msk [vmem:[#allocation2] sm:$0xff] %vm222, %v204
      %v225 = vld [vmem:[#allocation4] sm:$0xff]
      %v226 = vmul.f32 %v198, %v187
      %v227 = vsel %vm199, %v226, 0.0
      %228 = vadd.xlane.f32.xlu0 %v227
      %v229 = vpop.xlane.xlu0 %228
      %v230 = vadd.f32 %v225, %v229
      %231 = vst.msk [vmem:[#allocation4] sm:$0xff] %vm222, %v230
      // Predicated region
      $region33: #{tpu_custom_call.1} parent=27 // pred_check
        %p232 = pneg %p179
      $region34: #{tpu_custom_call.1} parent=27 // pred_check_branch
        %234 = sbr.rel (%p232) target = $region36
      $region35: #{tpu_custom_call.1} parent=27 // pred_region
        %v235 = vld [vmem:[#allocation2] sm:$0xff]
        %v236 = vld [vmem:[#allocation3] sm:$0xff]
        %v237 = vlog2.pop %v236
        %v238 = vmul.f32 %v237, 0.6931472
        %v239 = vadd.f32 %v235, %v238
        %v240 = vld [vmem:[#allocation4] sm:$0xff]
        %v241 = vsub.f32 %v239, %v240
        %v242 = vlaneseq
        %v243 = vshrl.u32 %v242, 7
        %s244 = smul.u32 %s17, 8
        %v245 = vstv %s244
        %v246 = vadd.s32 %v243, %v245
        %vm247 = vcmp.lt.s32.totalorder %v246, 16
        %v248 = vsel %vm247, %v241, 0.0
        %249 = vst.msk [vmem:[%s178] sm:$0xff] %vm222, %v248
      $region36: #{tpu_custom_call.1} parent=27 // pred_fallthru
        _
      %p250 = scmp.lt.s32.totalorder %s17, 1
      %s251 = scalar_select %p250, %s17, 1
      %s252 = smul.addr %s251, 8
      %s253 = scalar_lea.vmem %s2, %s252
      // Predicated region
      $region37: #{tpu_custom_call.1} parent=27 // pred_check
        %p254 = pneg %p97
      $region38: #{tpu_custom_call.1} parent=27 // pred_check_branch
        %256 = sbr.rel (%p254) target = $region40
      $region39: #{tpu_custom_call.1} parent=27 // pred_region
        _
      $region40: #{tpu_custom_call.1} parent=27 // pred_fallthru
        _
    $region28: #{tpu_custom_call.1} parent=5 // pred_fallthru
      _
    %p257 = scmp.le.s32.totalorder 2, %s8
    // Predicated region
    $region41: #{tpu_custom_call.1} parent=5 // pred_check
      %p258 = pneg %p257
    $region42: #{tpu_custom_call.1} parent=5 // pred_check_branch
      %260 = sbr.rel (%p258) target = $region44
    $region43: #{tpu_custom_call.1} parent=5 // pred_region
      %s261 = ssub.s32 %s8, 2
      // Predicated region
      $region45: #{tpu_custom_call.1} parent=43 // pred_check
        %p262 = pneg %p103
      $region46: #{tpu_custom_call.1} parent=43 // pred_check_branch
        %264 = sbr.rel (%p262) target = $region48
      $region47: #{tpu_custom_call.1} parent=43 // pred_region
        %p265 = scmp.lt.s32.totalorder %s19, 1
        %s266 = scalar_select %p265, %s19, 1
        %s267 = smul.addr %s266, 8
        %s268 = scalar_lea.vmem %s2, %s267
      $region48: #{tpu_custom_call.1} parent=43 // pred_fallthru
        _
    $region44: #{tpu_custom_call.1} parent=5 // pred_fallthru
      _
  $region6: #{tpu_custom_call.1} parent=0 // loop_footer
    %s12 = sadd.s32 1, %s8
  $region7: #{tpu_custom_call.1} parent=0 // loop_footer_branch
    %7 = sbr.rel target = $region3
  $region8: #{tpu_custom_call.1} parent=0 // loop_exit
    _

</llo_original>
